<compile_context>
chip_gen: v5e
topology: v5e:2x2
jax: 0.10.0
libtpu: 0.0.40
codegen_flags: <defaults>
</compile_context>

<pallas_src>
import functools

import jax
import jax.numpy as jnp
from jax.experimental import pallas as pl
from jax.experimental.pallas import tpu as pltpu

_EPS = 1e-6


def _dce_kernel(logits_ref, target_ref, out_ref, *,
                class_weights, nll, hw_total, needs_mask):
    C = logits_ref.shape[0]
    S = target_ref.shape[0]

    t_i = target_ref[...]                                    # (S, 128) int
    x0 = logits_ref[0].astype(jnp.float32)                   # (S, 128)

    # Unrolled channel pass: running first-occurrence argmax + one-hot selects.
    best_val = x0
    best_idx = jnp.zeros_like(x0)
    x_at_t = jnp.where(t_i == 0, x0, 0.0)
    w_at_t = jnp.where(t_i == 0, jnp.float32(class_weights[0]), 0.0)
    for c in range(1, C):
        xc = logits_ref[c].astype(jnp.float32)
        upd = xc > best_val                                   # strict > keeps first occurrence
        best_val = jnp.where(upd, xc, best_val)
        best_idx = jnp.where(upd, jnp.float32(c), best_idx)
        sel = t_i == c
        x_at_t = jnp.where(sel, xc, x_at_t)
        w_at_t = jnp.where(sel, jnp.float32(class_weights[c]), w_at_t)

    if nll:
        # Module's nll=True path: NLLLoss(log(input), target) == -log(p_y).
        # Non-positive inputs give NaN/Inf, matching PyTorch semantics.
        per_pix = -jnp.log(x_at_t)
    else:
        # log-sum-exp, second unrolled pass over channels (EUP exp + VPU adds).
        ssum = jnp.exp(logits_ref[0].astype(jnp.float32) - best_val)
        for c in range(1, C):
            ssum = ssum + jnp.exp(logits_ref[c].astype(jnp.float32) - best_val)
        per_pix = best_val + jnp.log(ssum) - x_at_t

    tf = t_i.astype(jnp.float32)
    c_inter = best_idx * tf                                   # intersect
    c_res = best_idx                                          # result_sum
    c_tgt = tf                                                # target_sum
    c_uni = ((best_idx + tf) > 0.0).astype(jnp.float32)       # union
    c_cen = w_at_t * per_pix                                  # CE numerator
    c_ced = w_at_t                                            # CE denominator

    if needs_mask:
        # Mask out the 128-padding and the partial last pixel block.
        base = pl.program_id(1) * S
        sub = jax.lax.broadcasted_iota(jnp.int32, (S, 128), 0)
        lane = jax.lax.broadcasted_iota(jnp.int32, (S, 128), 1)
        valid = (base + sub) * 128 + lane < hw_total

        def _m(v):
            return jnp.where(valid, v, 0.0)

        c_inter, c_res, c_tgt, c_uni, c_cen, c_ced = (
            _m(c_inter), _m(c_res), _m(c_tgt), _m(c_uni), _m(c_cen), _m(c_ced))

    def _rowsum(v):
        # (S,128) -> (8,128) via whole-vreg adds (no cross-lane work).
        if S % 8 == 0 and S >= 8:
            return jnp.sum(v.reshape(S // 8, 8, 128), axis=0)
        return v

    out_ref[0] = _rowsum(c_inter)
    out_ref[1] = _rowsum(c_res)
    out_ref[2] = _rowsum(c_tgt)
    out_ref[3] = _rowsum(c_uni)
    out_ref[4] = _rowsum(c_cen)
    out_ref[5] = _rowsum(c_ced)


def _choose_s_blk(hw_blk, c, elem_bytes):
    """Largest layout-legal sublane block under a ~4 MiB/buffer logits budget."""
    budget = 4 * 1024 * 1024
    max_s = budget // max(1, c * 128 * elem_bytes)
    max_s = max(8, min(2048, (max_s // 8) * 8))   # cap bounds intermediate VMEM too
    if hw_blk <= max_s:
        return hw_blk                              # full extent: always layout-legal
    return max_s                                   # multiple of 8; tail handled by masking


def dice_cross_entropy_loss(input_nchw, target_nhw, *, loss="CE",
                            ce_weights=(1.0, 1.0), dce_weight=1.0, nll=False):
    """Forward pass of DiceCrossEntropyLoss. Returns (total, dice, IoU, ce)."""
    N, C, H, W = input_nchw.shape
    HW = H * W
    assert len(ce_weights) == C

    # Pad the flattened pixel axis to a multiple of 128 if needed (masked in-kernel).
    hw_pad = ((HW + 127) // 128) * 128
    x = input_nchw.reshape(N, C, HW)
    t = target_nhw.reshape(N, HW)
    if hw_pad != HW:
        x = jnp.pad(x, ((0, 0), (0, 0), (0, hw_pad - HW)))
        t = jnp.pad(t, ((0, 0), (0, hw_pad - HW)))
    hw_blk = hw_pad // 128

    elem_bytes = jnp.dtype(input_nchw.dtype).itemsize
    S_BLK = _choose_s_blk(hw_blk, C, elem_bytes)
    P = pl.cdiv(hw_blk, S_BLK)
    needs_mask = (hw_blk % S_BLK != 0) or (hw_pad != HW)
    R = 8 if (S_BLK % 8 == 0 and S_BLK >= 8) else S_BLK

    # Free reshapes only -- keep native dtype and NCHW channel ordering.
    logits = x.reshape(N, C, hw_blk, 128)
    tgt = t.reshape(N, hw_blk, 128)

    kernel = functools.partial(
        _dce_kernel,
        class_weights=tuple(float(v) for v in ce_weights),
        nll=bool(nll), hw_total=int(HW), needs_mask=bool(needs_mask))

    # Explicit scoped-VMEM budget: 2x double-buffered blocks + elementwise temps.
    logits_blk = C * S_BLK * 128 * elem_bytes
    tgt_blk = S_BLK * 128 * jnp.dtype(tgt.dtype).itemsize
    out_blk = 6 * R * 128 * 4
    vmem_limit = 2 * (logits_blk + tgt_blk + out_blk) + 14 * S_BLK * 128 * 4 + (2 << 20)
    vmem_limit = int(min(max(vmem_limit, 16 << 20), 48 << 20))

    partials = pl.pallas_call(
        kernel,
        out_shape=jax.ShapeDtypeStruct((N, P, 6, R, 128), jnp.float32),
        grid_spec=pltpu.PrefetchScalarGridSpec(
            num_scalar_prefetch=0,
            grid=(N, P),
            in_specs=[
                pl.BlockSpec((None, C, S_BLK, 128), lambda n, p: (n, 0, p, 0)),
                pl.BlockSpec((None, S_BLK, 128), lambda n, p: (n, p, 0)),
            ],
            out_specs=pl.BlockSpec((None, None, 6, R, 128),
                                   lambda n, p: (n, p, 0, 0, 0)),
        ),
        # No cross-step state -> fully parallel grid (megacore / dual-TC friendly).
        compiler_params=pltpu.CompilerParams(
            dimension_semantics=("parallel", "parallel"),
            vmem_limit_bytes=vmem_limit),
    )(logits, tgt)

    # Tiny epilogue: reduce the per-program partials and form the scalars.
    sums = jnp.sum(partials, axis=(0, 1, 3, 4))           # (6,)
    inter, rs, ts, uni, cn, cd = (sums[i] for i in range(6))
    sum_of_pixels = rs + ts + 2.0 * _EPS
    dice = 2.0 * inter / sum_of_pixels
    iou = inter / (uni + _EPS)
    ce = cn / cd
    dl = 1.0 - dice
    if loss == "CE":
        total = ce
    elif loss == "D":
        total = dl
    else:  # 'DCE'
        total = dl + dce_weight * ce
    return total, dice, iou, ce


def _reference(input_nchw, target_nhw, loss, ce_weights, dce_weight, nll):
    """Pure-JAX reference mirroring the PyTorch module."""
    eps = 1e-6
    x = input_nchw.astype(jnp.float32)
    t = target_nhw.astype(jnp.float32)
    res = jnp.argmax(x, axis=1).astype(jnp.float32)
    intersect = jnp.sum(res * t)
    rsum = jnp.sum(res)
    tsum = jnp.sum(t)
    union = jnp.sum(((res + t) > 0).astype(jnp.float32))
    sop = rsum + tsum + 2 * eps
    dice = 2 * intersect / sop
    iou = intersect / (union + eps)
    dl = 1.0 - dice
    wvec = jnp.asarray(ce_weights, jnp.float32)
    y = target_nhw.astype(jnp.int32)
    logp = jnp.log(x) if nll else jax.nn.log_softmax(x, axis=1)
    logp_y = jnp.take_along_axis(logp, y[:, None], axis=1)[:, 0]
    wy = wvec[y]
    ce = -jnp.sum(wy * logp_y) / jnp.sum(wy)
    if loss == "CE":
        total = ce
    elif loss == "D":
        total = dl
    else:
        total = dl + dce_weight * ce
    return total, dice, iou, ce


if __name__ == "__main__":
    key = jax.random.PRNGKey(0)
    k1, k2 = jax.random.split(key)

    N, C, H, W = 2, 4, 16, 16               # 4-class segmentation
    x = jax.random.normal(k1, (N, C, H, W), dtype=jnp.float32)
    target = jax.random.randint(k2, (N, H, W), 0, C, dtype=jnp.int32)

    cfg = dict(loss="DCE", ce_weights=(1.0, 2.0, 0.5, 1.5),
               dce_weight=0.7, nll=False)

    total, dice, iou, ce = dice_cross_entropy_loss(x, target, **cfg)
    jax.block_until_ready(total)

    ref_total, ref_dice, ref_iou, ref_ce = _reference(x, target, **cfg)

    ok = True
    for got, ref in ((total, ref_total), (dice, ref_dice),
                     (iou, ref_iou), (ce, ref_ce)):
        ok &= bool(jnp.allclose(got, ref, rtol=1e-4, atol=1e-5))

    if ok:
        print("KERNEL_OK")
    else:
        print("MISMATCH",
              (float(total), float(dice), float(iou), float(ce)),
              (float(ref_total), float(ref_dice), float(ref_iou), float(ref_ce)))
</pallas_src>

<mosaic_0001>
module attributes {stable_mosaic.version = 11 : i64} {
  func.func @_dce_kernel(%arg0: i32, %arg1: i32, %arg2: memref<1x4x2x128xf32, #tpu.memory_space<vmem>>, %arg3: memref<1x2x128xi32, #tpu.memory_space<vmem>>, %arg4: memref<1x1x6x2x128xf32, #tpu.memory_space<vmem>>) attributes {dimension_semantics = [#tpu.dimension_semantics<parallel>, #tpu.dimension_semantics<parallel>], iteration_bounds = array<i64: 2, 1>, scalar_prefetch = 0 : i64, scratch_operands = 0 : i64, tpu.core_type = #tpu.core_type<tc>, window_params = [{transform_indices = @transform_0, window_bounds = array<i64: 1, 4, 2, 128>}, {transform_indices = @transform_1, window_bounds = array<i64: 1, 2, 128>}, {transform_indices = @transform_2, window_bounds = array<i64: 1, 1, 6, 2, 128>}]} {
    %c0 = arith.constant 0 : index
    %c0_0 = arith.constant 0 : index
    %c0_1 = arith.constant 0 : index
    %0 = vector.load %arg3[%c0, %c0_0, %c0_1] : memref<1x2x128xi32, #tpu.memory_space<vmem>>, vector<1x2x128xi32>
    %1 = vector.shape_cast %0 : vector<1x2x128xi32> to vector<2x128xi32>
    %c0_2 = arith.constant 0 : index
    %c0_3 = arith.constant 0 : index
    %c0_4 = arith.constant 0 : index
    %c0_5 = arith.constant 0 : index
    %2 = vector.load %arg2[%c0_2, %c0_3, %c0_4, %c0_5] : memref<1x4x2x128xf32, #tpu.memory_space<vmem>>, vector<1x1x2x128xf32>
    %3 = vector.shape_cast %2 : vector<1x1x2x128xf32> to vector<2x128xf32>
    %cst = arith.constant 0.000000e+00 : f32
    %4 = vector.broadcast %cst : f32 to vector<2x128xf32>
    %c0_i32 = arith.constant 0 : i32
    %5 = vector.broadcast %c0_i32 : i32 to vector<2x128xi32>
    %6 = arith.cmpi eq, %1, %5 : vector<2x128xi32>
    %cst_6 = arith.constant 0.000000e+00 : f32
    %7 = vector.broadcast %cst_6 : f32 to vector<2x128xf32>
    %8 = arith.select %6, %3, %7 : vector<2x128xi1>, vector<2x128xf32>
    %c0_i32_7 = arith.constant 0 : i32
    %9 = vector.broadcast %c0_i32_7 : i32 to vector<2x128xi32>
    %10 = arith.cmpi eq, %1, %9 : vector<2x128xi32>
    %cst_8 = arith.constant 1.000000e+00 : f32
    %cst_9 = arith.constant 0.000000e+00 : f32
    %11 = vector.broadcast %cst_8 : f32 to vector<2x128xf32>
    %12 = vector.broadcast %cst_9 : f32 to vector<2x128xf32>
    %13 = arith.select %10, %11, %12 : vector<2x128xi1>, vector<2x128xf32>
    %c0_10 = arith.constant 0 : index
    %c1 = arith.constant 1 : index
    %c0_11 = arith.constant 0 : index
    %c0_12 = arith.constant 0 : index
    %14 = vector.load %arg2[%c0_10, %c1, %c0_11, %c0_12] : memref<1x4x2x128xf32, #tpu.memory_space<vmem>>, vector<1x1x2x128xf32>
    %15 = vector.shape_cast %14 : vector<1x1x2x128xf32> to vector<2x128xf32>
    %16 = arith.cmpf ogt, %15, %3 : vector<2x128xf32>
    %17 = arith.select %16, %15, %3 : vector<2x128xi1>, vector<2x128xf32>
    %cst_13 = arith.constant 1.000000e+00 : f32
    %18 = vector.broadcast %cst_13 : f32 to vector<2x128xf32>
    %19 = arith.select %16, %18, %4 : vector<2x128xi1>, vector<2x128xf32>
    %c1_i32 = arith.constant 1 : i32
    %20 = vector.broadcast %c1_i32 : i32 to vector<2x128xi32>
    %21 = arith.cmpi eq, %1, %20 : vector<2x128xi32>
    %22 = arith.select %21, %15, %8 : vector<2x128xi1>, vector<2x128xf32>
    %cst_14 = arith.constant 2.000000e+00 : f32
    %23 = vector.broadcast %cst_14 : f32 to vector<2x128xf32>
    %24 = arith.select %21, %23, %13 : vector<2x128xi1>, vector<2x128xf32>
    %c0_15 = arith.constant 0 : index
    %c2 = arith.constant 2 : index
    %c0_16 = arith.constant 0 : index
    %c0_17 = arith.constant 0 : index
    %25 = vector.load %arg2[%c0_15, %c2, %c0_16, %c0_17] : memref<1x4x2x128xf32, #tpu.memory_space<vmem>>, vector<1x1x2x128xf32>
    %26 = vector.shape_cast %25 : vector<1x1x2x128xf32> to vector<2x128xf32>
    %27 = arith.cmpf ogt, %26, %17 : vector<2x128xf32>
    %28 = arith.select %27, %26, %17 : vector<2x128xi1>, vector<2x128xf32>
    %cst_18 = arith.constant 2.000000e+00 : f32
    %29 = vector.broadcast %cst_18 : f32 to vector<2x128xf32>
    %30 = arith.select %27, %29, %19 : vector<2x128xi1>, vector<2x128xf32>
    %c2_i32 = arith.constant 2 : i32
    %31 = vector.broadcast %c2_i32 : i32 to vector<2x128xi32>
    %32 = arith.cmpi eq, %1, %31 : vector<2x128xi32>
    %33 = arith.select %32, %26, %22 : vector<2x128xi1>, vector<2x128xf32>
    %cst_19 = arith.constant 5.000000e-01 : f32
    %34 = vector.broadcast %cst_19 : f32 to vector<2x128xf32>
    %35 = arith.select %32, %34, %24 : vector<2x128xi1>, vector<2x128xf32>
    %c0_20 = arith.constant 0 : index
    %c3 = arith.constant 3 : index
    %c0_21 = arith.constant 0 : index
    %c0_22 = arith.constant 0 : index
    %36 = vector.load %arg2[%c0_20, %c3, %c0_21, %c0_22] : memref<1x4x2x128xf32, #tpu.memory_space<vmem>>, vector<1x1x2x128xf32>
    %37 = vector.shape_cast %36 : vector<1x1x2x128xf32> to vector<2x128xf32>
    %38 = arith.cmpf ogt, %37, %28 : vector<2x128xf32>
    %39 = arith.select %38, %37, %28 : vector<2x128xi1>, vector<2x128xf32>
    %cst_23 = arith.constant 3.000000e+00 : f32
    %40 = vector.broadcast %cst_23 : f32 to vector<2x128xf32>
    %41 = arith.select %38, %40, %30 : vector<2x128xi1>, vector<2x128xf32>
    %c3_i32 = arith.constant 3 : i32
    %42 = vector.broadcast %c3_i32 : i32 to vector<2x128xi32>
    %43 = arith.cmpi eq, %1, %42 : vector<2x128xi32>
    %44 = arith.select %43, %37, %33 : vector<2x128xi1>, vector<2x128xf32>
    %cst_24 = arith.constant 1.500000e+00 : f32
    %45 = vector.broadcast %cst_24 : f32 to vector<2x128xf32>
    %46 = arith.select %43, %45, %35 : vector<2x128xi1>, vector<2x128xf32>
    %c0_25 = arith.constant 0 : index
    %c0_26 = arith.constant 0 : index
    %c0_27 = arith.constant 0 : index
    %c0_28 = arith.constant 0 : index
    %47 = vector.load %arg2[%c0_25, %c0_26, %c0_27, %c0_28] : memref<1x4x2x128xf32, #tpu.memory_space<vmem>>, vector<1x1x2x128xf32>
    %48 = vector.shape_cast %47 : vector<1x1x2x128xf32> to vector<2x128xf32>
    %49 = arith.subf %48, %39 : vector<2x128xf32>
    %50 = math.exp %49 : vector<2x128xf32>
    %c0_29 = arith.constant 0 : index
    %c1_30 = arith.constant 1 : index
    %c0_31 = arith.constant 0 : index
    %c0_32 = arith.constant 0 : index
    %51 = vector.load %arg2[%c0_29, %c1_30, %c0_31, %c0_32] : memref<1x4x2x128xf32, #tpu.memory_space<vmem>>, vector<1x1x2x128xf32>
    %52 = vector.shape_cast %51 : vector<1x1x2x128xf32> to vector<2x128xf32>
    %53 = arith.subf %52, %39 : vector<2x128xf32>
    %54 = math.exp %53 : vector<2x128xf32>
    %55 = arith.addf %50, %54 : vector<2x128xf32>
    %c0_33 = arith.constant 0 : index
    %c2_34 = arith.constant 2 : index
    %c0_35 = arith.constant 0 : index
    %c0_36 = arith.constant 0 : index
    %56 = vector.load %arg2[%c0_33, %c2_34, %c0_35, %c0_36] : memref<1x4x2x128xf32, #tpu.memory_space<vmem>>, vector<1x1x2x128xf32>
    %57 = vector.shape_cast %56 : vector<1x1x2x128xf32> to vector<2x128xf32>
    %58 = arith.subf %57, %39 : vector<2x128xf32>
    %59 = math.exp %58 : vector<2x128xf32>
    %60 = arith.addf %55, %59 : vector<2x128xf32>
    %c0_37 = arith.constant 0 : index
    %c3_38 = arith.constant 3 : index
    %c0_39 = arith.constant 0 : index
    %c0_40 = arith.constant 0 : index
    %61 = vector.load %arg2[%c0_37, %c3_38, %c0_39, %c0_40] : memref<1x4x2x128xf32, #tpu.memory_space<vmem>>, vector<1x1x2x128xf32>
    %62 = vector.shape_cast %61 : vector<1x1x2x128xf32> to vector<2x128xf32>
    %63 = arith.subf %62, %39 : vector<2x128xf32>
    %64 = math.exp %63 : vector<2x128xf32>
    %65 = arith.addf %60, %64 : vector<2x128xf32>
    %66 = math.log %65 : vector<2x128xf32>
    %67 = arith.addf %39, %66 : vector<2x128xf32>
    %68 = arith.subf %67, %44 : vector<2x128xf32>
    %69 = arith.sitofp %1 : vector<2x128xi32> to vector<2x128xf32>
    %70 = arith.mulf %41, %69 : vector<2x128xf32>
    %71 = arith.addf %41, %69 : vector<2x128xf32>
    %cst_41 = arith.constant 0.000000e+00 : f32
    %72 = vector.broadcast %cst_41 : f32 to vector<2x128xf32>
    %73 = arith.cmpf ogt, %71, %72 : vector<2x128xf32>
    %74 = arith.extui %73 : vector<2x128xi1> to vector<2x128xi32>
    %75 = arith.sitofp %74 : vector<2x128xi32> to vector<2x128xf32>
    %76 = arith.mulf %46, %68 : vector<2x128xf32>
    %c0_42 = arith.constant 0 : index
    %c0_43 = arith.constant 0 : index
    %c0_44 = arith.constant 0 : index
    %c0_45 = arith.constant 0 : index
    %c0_46 = arith.constant 0 : index
    %77 = vector.load %arg4[%c0_42, %c0_43, %c0_44, %c0_45, %c0_46] : memref<1x1x6x2x128xf32, #tpu.memory_space<vmem>>, vector<1x1x1x2x128xf32>
    %78 = vector.shape_cast %77 : vector<1x1x1x2x128xf32> to vector<2x128xf32>
    %79 = vector.shape_cast %70 : vector<2x128xf32> to vector<1x1x1x2x128xf32>
    tpu.vector_store %arg4[%c0_42, %c0_43, %c0_44, %c0_45, %c0_46], %79 {strides = array<i32>} : memref<1x1x6x2x128xf32, #tpu.memory_space<vmem>>, vector<1x1x1x2x128xf32>,
    %c0_47 = arith.constant 0 : index
    %c0_48 = arith.constant 0 : index
    %c1_49 = arith.constant 1 : index
    %c0_50 = arith.constant 0 : index
    %c0_51 = arith.constant 0 : index
    %80 = vector.load %arg4[%c0_47, %c0_48, %c1_49, %c0_50, %c0_51] : memref<1x1x6x2x128xf32, #tpu.memory_space<vmem>>, vector<1x1x1x2x128xf32>
    %81 = vector.shape_cast %80 : vector<1x1x1x2x128xf32> to vector<2x128xf32>
    %82 = vector.shape_cast %41 : vector<2x128xf32> to vector<1x1x1x2x128xf32>
    tpu.vector_store %arg4[%c0_47, %c0_48, %c1_49, %c0_50, %c0_51], %82 {strides = array<i32>} : memref<1x1x6x2x128xf32, #tpu.memory_space<vmem>>, vector<1x1x1x2x128xf32>,
    %c0_52 = arith.constant 0 : index
    %c0_53 = arith.constant 0 : index
    %c2_54 = arith.constant 2 : index
    %c0_55 = arith.constant 0 : index
    %c0_56 = arith.constant 0 : index
    %83 = vector.load %arg4[%c0_52, %c0_53, %c2_54, %c0_55, %c0_56] : memref<1x1x6x2x128xf32, #tpu.memory_space<vmem>>, vector<1x1x1x2x128xf32>
    %84 = vector.shape_cast %83 : vector<1x1x1x2x128xf32> to vector<2x128xf32>
    %85 = vector.shape_cast %69 : vector<2x128xf32> to vector<1x1x1x2x128xf32>
    tpu.vector_store %arg4[%c0_52, %c0_53, %c2_54, %c0_55, %c0_56], %85 {strides = array<i32>} : memref<1x1x6x2x128xf32, #tpu.memory_space<vmem>>, vector<1x1x1x2x128xf32>,
    %c0_57 = arith.constant 0 : index
    %c0_58 = arith.constant 0 : index
    %c3_59 = arith.constant 3 : index
    %c0_60 = arith.constant 0 : index
    %c0_61 = arith.constant 0 : index
    %86 = vector.load %arg4[%c0_57, %c0_58, %c3_59, %c0_60, %c0_61] : memref<1x1x6x2x128xf32, #tpu.memory_space<vmem>>, vector<1x1x1x2x128xf32>
    %87 = vector.shape_cast %86 : vector<1x1x1x2x128xf32> to vector<2x128xf32>
    %88 = vector.shape_cast %75 : vector<2x128xf32> to vector<1x1x1x2x128xf32>
    tpu.vector_store %arg4[%c0_57, %c0_58, %c3_59, %c0_60, %c0_61], %88 {strides = array<i32>} : memref<1x1x6x2x128xf32, #tpu.memory_space<vmem>>, vector<1x1x1x2x128xf32>,
    %c0_62 = arith.constant 0 : index
    %c0_63 = arith.constant 0 : index
    %c4 = arith.constant 4 : index
    %c0_64 = arith.constant 0 : index
    %c0_65 = arith.constant 0 : index
    %89 = vector.load %arg4[%c0_62, %c0_63, %c4, %c0_64, %c0_65] : memref<1x1x6x2x128xf32, #tpu.memory_space<vmem>>, vector<1x1x1x2x128xf32>
    %90 = vector.shape_cast %89 : vector<1x1x1x2x128xf32> to vector<2x128xf32>
    %91 = vector.shape_cast %76 : vector<2x128xf32> to vector<1x1x1x2x128xf32>
    tpu.vector_store %arg4[%c0_62, %c0_63, %c4, %c0_64, %c0_65], %91 {strides = array<i32>} : memref<1x1x6x2x128xf32, #tpu.memory_space<vmem>>, vector<1x1x1x2x128xf32>,
    %c0_66 = arith.constant 0 : index
    %c0_67 = arith.constant 0 : index
    %c5 = arith.constant 5 : index
    %c0_68 = arith.constant 0 : index
    %c0_69 = arith.constant 0 : index
    %92 = vector.load %arg4[%c0_66, %c0_67, %c5, %c0_68, %c0_69] : memref<1x1x6x2x128xf32, #tpu.memory_space<vmem>>, vector<1x1x1x2x128xf32>
    %93 = vector.shape_cast %92 : vector<1x1x1x2x128xf32> to vector<2x128xf32>
    %94 = vector.shape_cast %46 : vector<2x128xf32> to vector<1x1x1x2x128xf32>
    tpu.vector_store %arg4[%c0_66, %c0_67, %c5, %c0_68, %c0_69], %94 {strides = array<i32>} : memref<1x1x6x2x128xf32, #tpu.memory_space<vmem>>, vector<1x1x1x2x128xf32>,
    return
  }
  func.func @transform_0(%arg0: i32, %arg1: i32) -> (i32, i32, i32, i32) {
    %c0_i32 = arith.constant 0 : i32
    %c0_i32_0 = arith.constant 0 : i32
    %c0_i32_1 = arith.constant 0 : i32
    return %arg0, %c0_i32, %arg1, %c0_i32_0 : i32, i32, i32, i32
  }
  func.func @transform_1(%arg0: i32, %arg1: i32) -> (i32, i32, i32) {
    %c0_i32 = arith.constant 0 : i32
    %c0_i32_0 = arith.constant 0 : i32
    return %arg0, %arg1, %c0_i32 : i32, i32, i32
  }
  func.func @transform_2(%arg0: i32, %arg1: i32) -> (i32, i32, i32, i32, i32) {
    %c0_i32 = arith.constant 0 : i32
    %c0_i32_0 = arith.constant 0 : i32
    %c0_i32_1 = arith.constant 0 : i32
    %c0_i32_2 = arith.constant 0 : i32
    return %arg0, %arg1, %c0_i32, %c0_i32_0, %c0_i32_1 : i32, i32, i32, i32, i32
  }
}

</mosaic_0001>

<llo_original>
// kernel: tpu_custom_call.1
$region0: #{tpu_custom_call.1}
  #allocation0 [shape = 'u32[]', space=smem, size = 0x4, offset = 0x4, fixed_abs, tag = 'smem constant byte address 0x4 - core index']
  #allocation1 [shape = 'u32[72,128]{1,0:T(1,128)}', space=vmem, size = 0x9000, scoped, tag = 'internal scratch']
  %s0 = inlined_call_operand.hbm [shape: f32[2,4,2,128], index: 0, kind: input, shape index: {}]
  %s1 = inlined_call_operand.hbm [shape: s32[2,2,128], index: 1, kind: input, shape index: {}]
  %s2 = inlined_call_operand.hbm [shape: f32[2,1,6,2,128], index: 2, kind: output, shape index: {}]
  %s3 = sld [smem:[#allocation0]]
  $region49: #{tpu_custom_call.1} parent=0
    _
  %s5 = ssub.s32 1, %s3
  %s6 = scalar_select 0, %s5, %s3
  $region1: #{tpu_custom_call.1} parent=0
    #allocation2 [shape = 'u8[8192]{0}', space=vmem, size = 0x2000, scoped, tag = 'input window, operand 0']
    #allocation3 [shape = 's32[2]{0}', space=sflag, size = 0x8, scoped, tag = 'scoped memory for tpu_custom_call.1']
    #allocation4 [shape = 's32[2]{0}', space=sflag, size = 0x8, scoped, tag = 'scoped memory for tpu_custom_call.1']
    #allocation5 [shape = 'u8[2048]{0}', space=vmem, size = 0x800, scoped, tag = 'input window, operand 1']
    #allocation6 [shape = 's32[2]{0}', space=sflag, size = 0x8, scoped, tag = 'scoped memory for tpu_custom_call.1']
    #allocation7 [shape = 'u8[12288]{0}', space=vmem, size = 0x3000, scoped, tag = 'output window, operand 0']
    %7 = vsyncpa [#allocation3], 0
    %s8 = scalar_lea.sflag [#allocation3], 1
    %9 = vsyncpa %s8, 0
    %10 = vsyncpa [#allocation6], 0
    %s11 = scalar_lea.sflag [#allocation6], 1
    %12 = vsyncpa %s11, 0
    %13 = vsyncpa [#allocation4], 0
    %s14 = scalar_lea.sflag [#allocation4], 1
    %15 = vsyncpa %s14, 0
    loop: start=0, step=1, limit=4
    $region2: #{tpu_custom_call.1} parent=1 // loop_pre_header
      _
    $region3: #{tpu_custom_call.1} parent=1 // loop_header
      %s17 = sphi 0, %s21
      %p18 = scmp.ge.s32.totalorder %s17, 4
      %s24 = sphi 0, %s36
      %s25 = sphi 0, %s32
      %s26 = sphi 0, %s24
      %s27 = sphi 0, %s25
      %s28 = sphi 0, %s26
      %s29 = sphi 0, %s27
      %s41 = sphi 0, %s43
      %s44 = sphi 0, %s41
      %s45 = sphi 0, %s44
      %s61 = sphi 0, %s45
      %s69 = sphi 0, %s71
      %s72 = sphi 0, %s69
      %s73 = sphi 0, %s72
      %s89 = sphi 0, %s73
      %s97 = sphi 0, %s99
      %s100 = sphi 0, %s97
      %s101 = sphi 0, %s100
      %s117 = sphi 0, %s101
    $region4: #{tpu_custom_call.1} parent=1 // loop_header_branch
      %20 = sbr.rel (%p18) target = $region8
    $region5: #{tpu_custom_call.1} parent=1 // loop_body
      %s22 = ssub.s32 %s17, 1
      %s23 = ssub.s32 %s17, 2
      %s30 = sadd.s32 1, %s25
      %p31 = scmp.ge.s32.totalorder %s30, 1
      %s32 = scalar_select %p31, 0, %s30
      %s33 = sadd.s32 1, %s24
      %s34 = scalar_select %p31, %s33, %s24
      %p35 = scmp.ge.s32.totalorder %s34, 2
      %s36 = scalar_select %p35, 0, %s34
      %s37 = ssub.s32 %s24, %s36
      %s38 = ssub.s32 %s25, %s32
      %s39 = sor.u32 %s37, %s38
      %p40 = scmp.eq.s32.totalorder %s39, 0
      %s42 = sadd.s32 %s41, 1
      %s43 = scalar_select %p40, %s41, %s42
      %p46 = pneg %p40
      %p47 = scmp.eq.s32.totalorder %s17, 1
      %p48 = por %p46, %p47
      %p49 = scmp.ne.s32.totalorder %s41, %s44
      %p50 = scmp.eq.s32.totalorder %s17, 0
      %p51 = por %p49, %p50
      %p52 = scmp.ne.s32.totalorder %s41, %s44
      %p53 = scmp.eq.s32.totalorder %s22, 1
      %p54 = por %p52, %p53
      %p55 = scmp.ne.s32.totalorder %s44, %s45
      %p56 = scmp.eq.s32.totalorder %s22, 0
      %p57 = por %p55, %p56
      %p58 = scmp.ne.s32.totalorder %s44, %s45
      %p59 = scmp.eq.s32.totalorder %s23, 1
      %p60 = por %p58, %p59
      %p62 = scmp.ne.s32.totalorder %s45, %s61
      %p63 = scmp.eq.s32.totalorder %s23, 0
      %p64 = por %p62, %p63
      %s65 = ssub.s32 %s24, %s36
      %s66 = ssub.s32 %s25, %s32
      %s67 = sor.u32 %s65, %s66
      %p68 = scmp.eq.s32.totalorder %s67, 0
      %s70 = sadd.s32 %s69, 1
      %s71 = scalar_select %p68, %s69, %s70
      %p74 = pneg %p68
      %p75 = scmp.eq.s32.totalorder %s17, 1
      %p76 = por %p74, %p75
      %p77 = scmp.ne.s32.totalorder %s69, %s72
      %p78 = scmp.eq.s32.totalorder %s17, 0
      %p79 = por %p77, %p78
      %p80 = scmp.ne.s32.totalorder %s69, %s72
      %p81 = scmp.eq.s32.totalorder %s22, 1
      %p82 = por %p80, %p81
      %p83 = scmp.ne.s32.totalorder %s72, %s73
      %p84 = scmp.eq.s32.totalorder %s22, 0
      %p85 = por %p83, %p84
      %p86 = scmp.ne.s32.totalorder %s72, %s73
      %p87 = scmp.eq.s32.totalorder %s23, 1
      %p88 = por %p86, %p87
      %p90 = scmp.ne.s32.totalorder %s73, %s89
      %p91 = scmp.eq.s32.totalorder %s23, 0
      %p92 = por %p90, %p91
      %s93 = ssub.s32 %s24, %s36
      %s94 = ssub.s32 %s25, %s32
      %s95 = sor.u32 %s93, %s94
      %p96 = scmp.eq.s32.totalorder %s95, 0
      %s98 = sadd.s32 %s97, 1
      %s99 = scalar_select %p96, %s97, %s98
      %p102 = pneg %p96
      %p103 = scmp.eq.s32.totalorder %s17, 1
      %p104 = por %p102, %p103
      %p105 = scmp.ne.s32.totalorder %s97, %s100
      %p106 = scmp.eq.s32.totalorder %s17, 0
      %p107 = por %p105, %p106
      %p108 = scmp.ne.s32.totalorder %s97, %s100
      %p109 = scmp.eq.s32.totalorder %s22, 1
      %p110 = por %p108, %p109
      %p111 = scmp.ne.s32.totalorder %s100, %s101
      %p112 = scmp.eq.s32.totalorder %s22, 0
      %p113 = por %p111, %p112
      %p114 = scmp.ne.s32.totalorder %s100, %s101
      %p115 = scmp.eq.s32.totalorder %s23, 1
      %p116 = por %p114, %p115
      %p118 = scmp.ne.s32.totalorder %s101, %s117
      %p119 = scmp.eq.s32.totalorder %s23, 0
      %p120 = por %p118, %p119
      %p121 = scmp.le.s32.totalorder 1, %s17
      %p122 = scmp.lt.s32.totalorder %s17, 3
      %p123 = pnand %p121, %p122
      %p124 = pneg %p123
      // Predicated region
      $region9: #{tpu_custom_call.1} parent=5 // pred_check
        _
      $region10: #{tpu_custom_call.1} parent=5 // pred_check_branch
        %126 = sbr.rel (%p123) target = $region12
      $region11: #{tpu_custom_call.1} parent=5 // pred_region
        %s127 = ssub.s32 %s17, 1
      $region12: #{tpu_custom_call.1} parent=5 // pred_fallthru
        _
      %p128 = scmp.lt.s32.totalorder %s17, 2
      // Predicated region
      $region13: #{tpu_custom_call.1} parent=5 // pred_check
        %p129 = pneg %p128
      $region14: #{tpu_custom_call.1} parent=5 // pred_check_branch
        %131 = sbr.rel (%p129) target = $region16
      $region15: #{tpu_custom_call.1} parent=5 // pred_region
        // Predicated region
        $region17: #{tpu_custom_call.1} parent=15 // pred_check
          %p132 = pneg %p51
        $region18: #{tpu_custom_call.1} parent=15 // pred_check_branch
          %134 = sbr.rel (%p132) target = $region20
        $region19: #{tpu_custom_call.1} parent=15 // pred_region
          %s135 = sand.u32 %s41, 1
          %s136 = scalar_lea.sflag [#allocation3], %s135
          %s137 = sand.u32 %s41, 1
          %s138 = smul.addr %s137, 8
          %s139 = scalar_lea.vmem [#allocation2], %s138
          %141 = vsyncadd %s136, 0
          %s142 = smul.addr %s24, 4
          %s143 = sadd.s32 %s25, %s142
          %s144 = smul.addr %s143, 2
          %s145 = scalar_lea.hbm %s0, %s144
          %s146 = sshll.u32 %s145, 4
          %s147 = int_to_ptr.hbm [resolvable:$true] %s146
          %s148 = sshll.u32 %s139, 4
          %s149 = int_to_ptr.vmem [resolvable:$true] %s148
          %154 = dma.hbm_to_vmem [thread:$0]  %s147, 128, %s149, %s136, 32, 32, 2
        $region20: #{tpu_custom_call.1} parent=15 // pred_fallthru
          _
        // Predicated region
        $region21: #{tpu_custom_call.1} parent=15 // pred_check
          %p155 = pneg %p79
        $region22: #{tpu_custom_call.1} parent=15 // pred_check_branch
          %157 = sbr.rel (%p155) target = $region24
        $region23: #{tpu_custom_call.1} parent=15 // pred_region
          %s158 = sand.u32 %s69, 1
          %s159 = scalar_lea.sflag [#allocation6], %s158
          %s160 = sand.u32 %s69, 1
          %s161 = smul.addr %s160, 2
          %s162 = scalar_lea.vmem [#allocation5], %s161
          %164 = vsyncadd %s159, 0
          %s165 = sadd.s32 %s25, %s24
          %s166 = smul.addr %s165, 2
          %s167 = scalar_lea.hbm %s1, %s166
          %s169 = sshll.u32 %s167, 4
          %s170 = int_to_ptr.hbm [resolvable:$true] %s169
          %s171 = sshll.u32 %s162, 4
          %s172 = int_to_ptr.vmem [resolvable:$true] %s171
          %174 = dma.hbm_to_vmem [thread:$0]  %s170, 32, %s172, %s159
        $region24: #{tpu_custom_call.1} parent=15 // pred_fallthru
          _
      $region16: #{tpu_custom_call.1} parent=5 // pred_fallthru
        _
      %p175 = scmp.le.s32.totalorder 1, %s17
      %p176 = scmp.lt.s32.totalorder %s17, 3
      %p177 = pnand %p175, %p176
      %p178 = pneg %p177
      // Predicated region
      $region25: #{tpu_custom_call.1} parent=5 // pred_check
        _
      $region26: #{tpu_custom_call.1} parent=5 // pred_check_branch
        %180 = sbr.rel (%p177) target = $region28
      $region27: #{tpu_custom_call.1} parent=5 // pred_region
        %s181 = ssub.s32 %s17, 1
        %s182 = sand.u32 %s44, 1
        %s183 = scalar_lea.sflag [#allocation3], %s182
        %s184 = sand.u32 %s44, 1
        %s185 = smul.addr %s184, 8
        %s186 = scalar_lea.vmem [#allocation2], %s185
        // Predicated region
        $region29: #{tpu_custom_call.1} parent=27 // pred_check
          %p187 = pneg %p57
        $region30: #{tpu_custom_call.1} parent=27 // pred_check_branch
          %189 = sbr.rel (%p187) target = $region32
        $region31: #{tpu_custom_call.1} parent=27 // pred_region
          %191 = dma.done %s183, 128
        $region32: #{tpu_custom_call.1} parent=27 // pred_fallthru
          _
        %s192 = sand.u32 %s72, 1
        %s193 = scalar_lea.sflag [#allocation6], %s192
        %s194 = sand.u32 %s72, 1
        %s195 = smul.addr %s194, 2
        %s196 = scalar_lea.vmem [#allocation5], %s195
        // Predicated region
        $region33: #{tpu_custom_call.1} parent=27 // pred_check
          %p197 = pneg %p85
        $region34: #{tpu_custom_call.1} parent=27 // pred_check_branch
          %199 = sbr.rel (%p197) target = $region36
        $region35: #{tpu_custom_call.1} parent=27 // pred_region
          %201 = dma.done %s193, 32
        $region36: #{tpu_custom_call.1} parent=27 // pred_fallthru
          _
        %s202 = sand.u32 %s44, 1
        %s203 = scalar_lea.sflag [#allocation3], %s202
        %s204 = sand.u32 %s44, 1
        %s205 = smul.addr %s204, 8
        %s206 = scalar_lea.vmem [#allocation2], %s205
        %p207 = pneg %p57
        %p208 = pneg %p54
        %s209 = sand.u32 %s72, 1
        %s210 = scalar_lea.sflag [#allocation6], %s209
        %s211 = sand.u32 %s72, 1
        %s212 = smul.addr %s211, 2
        %s213 = scalar_lea.vmem [#allocation5], %s212
        %p214 = pneg %p85
        %p215 = pneg %p82
        %p216 = pneg %p113
        %p217 = pneg %p110
        %s218 = sand.u32 %s100, 1
        %s219 = scalar_lea.sflag [#allocation4], %s218
        %s220 = sand.u32 %s100, 1
        %s221 = smul.addr %s220, 12
        %s222 = scalar_lea.vmem [#allocation7], %s221
        %v223 = vld [vmem:[%s196] sm:$0x3]
        %v224 = vld [vmem:[%s186] sm:$0x3]
        %vm225 = vcmp.eq.s32.totalorder %v223, 0
        %v226 = vsel %vm225, %v224, 0.0
        %v227 = vsel %vm225, 1.0, 0.0
        %s228 = scalar_lea.vmem %s186, 2 [#allocation2]
        %v229 = vld [vmem:[%s228] sm:$0x3]
        %vm230 = vcmp.gt.f32.partialorder %v229, %v224
        %v231 = vsel %vm230, %v229, %v224
        %v232 = vsel %vm230, 1.0, 0.0
        %vm233 = vcmp.eq.s32.totalorder %v223, 1
        %v234 = vsel %vm233, %v229, %v226
        %v235 = vsel %vm233, 2.0, %v227
        %s236 = scalar_lea.vmem %s186, 4 [#allocation2]
        %v237 = vld [vmem:[%s236] sm:$0x3]
        %vm238 = vcmp.gt.f32.partialorder %v237, %v231
        %v239 = vsel %vm238, %v237, %v231
        %v240 = vsel %vm238, 2.0, %v232
        %vm241 = vcmp.eq.s32.totalorder %v223, 2
        %v242 = vsel %vm241, %v237, %v234
        %v243 = vsel %vm241, 0.5, %v235
        %s244 = scalar_lea.vmem %s186, 6 [#allocation2]
        %v245 = vld [vmem:[%s244] sm:$0x3]
        %vm246 = vcmp.gt.f32.partialorder %v245, %v239
        %v247 = vsel %vm246, %v245, %v239
        %v248 = vsel %vm246, 3.0, %v240
        %vm249 = vcmp.eq.s32.totalorder %v223, 3
        %v250 = vsel %vm249, %v245, %v242
        %v251 = vsel %vm249, 1.5, %v243
        %v252 = vsub.f32 %v224, %v247
        %v253 = vmul.f32 %v252, 1.442695
        %v254 = vpow.pop %v253
        %v255 = vsub.f32 %v229, %v247
        %v256 = vmul.f32 %v255, 1.442695
        %v257 = vpow.pop %v256
        %v258 = vadd.f32 %v254, %v257
        %v259 = vsub.f32 %v237, %v247
        %v260 = vmul.f32 %v259, 1.442695
        %v261 = vpow.pop %v260
        %v262 = vadd.f32 %v258, %v261
        %v263 = vsub.f32 %v245, %v247
        %v264 = vmul.f32 %v263, 1.442695
        %v265 = vpow.pop %v264
        %v266 = vadd.f32 %v262, %v265
        %v267 = vlog2.pop %v266
        %v268 = vmul.f32 %v267, 0.6931472
        %v269 = vadd.f32 %v247, %v268
        %v270 = vsub.f32 %v269, %v250
        %v271 = vcvt.s32.f32 %v223
        %v272 = vmul.f32 %v248, %v271
        %v273 = vadd.f32 %v248, %v271
        %vm274 = vcmp.gt.f32.partialorder %v273, 0.0
        %v275 = vsel %vm274, 1, 0
        %v276 = vcvt.s32.f32 %v275
        %v277 = vmul.f32 %v251, %v270
        %278 = vst [vmem:[%s222] sm:$0x3] %v272
        %s279 = scalar_lea.vmem %s222, 2 [#allocation7]
        %280 = vst [vmem:[%s279] sm:$0x3] %v248
        %s281 = scalar_lea.vmem %s222, 4 [#allocation7]
        %282 = vst [vmem:[%s281] sm:$0x3] %v271
        %s283 = scalar_lea.vmem %s222, 6 [#allocation7]
        %284 = vst [vmem:[%s283] sm:$0x3] %v276
        %s285 = scalar_lea.vmem %s222, 8 [#allocation7]
        %286 = vst [vmem:[%s285] sm:$0x3] %v277
        %s287 = scalar_lea.vmem %s222, 10 [#allocation7]
        %288 = vst [vmem:[%s287] sm:$0x3] %v251
        %s289 = sand.u32 %s100, 1
        %s290 = scalar_lea.sflag [#allocation4], %s289
        %s291 = sand.u32 %s100, 1
        %s292 = smul.addr %s291, 12
        %s293 = scalar_lea.vmem [#allocation7], %s292
        // Predicated region
        $region37: #{tpu_custom_call.1} parent=27 // pred_check
          %p294 = pneg %p110
        $region38: #{tpu_custom_call.1} parent=27 // pred_check_branch
          %296 = sbr.rel (%p294) target = $region40
        $region39: #{tpu_custom_call.1} parent=27 // pred_region
          %298 = vsyncadd %s290, 0
          %s299 = smul.addr %s27, 6
          %s300 = smul.addr %s26, 6
          %s301 = sadd.s32 %s299, %s300
          %s302 = smul.addr %s301, 2
          %s303 = scalar_lea.hbm %s2, %s302
          %s304 = sshll.u32 %s293, 4
          %s305 = int_to_ptr.vmem [resolvable:$true] %s304
          %s306 = sshll.u32 %s303, 4
          %s307 = int_to_ptr.hbm [resolvable:$true] %s306
          %312 = dma.vmem_to_hbm [thread:$0]  %s305, 192, %s307, %s290, 32, 32, 2
        $region40: #{tpu_custom_call.1} parent=27 // pred_fallthru
          _
      $region28: #{tpu_custom_call.1} parent=5 // pred_fallthru
        _
      %p313 = scmp.le.s32.totalorder 2, %s17
      // Predicated region
      $region41: #{tpu_custom_call.1} parent=5 // pred_check
        %p314 = pneg %p313
      $region42: #{tpu_custom_call.1} parent=5 // pred_check_branch
        %316 = sbr.rel (%p314) target = $region44
      $region43: #{tpu_custom_call.1} parent=5 // pred_region
        %s317 = ssub.s32 %s17, 2
        // Predicated region
        $region45: #{tpu_custom_call.1} parent=43 // pred_check
          %p318 = pneg %p116
        $region46: #{tpu_custom_call.1} parent=43 // pred_check_branch
          %320 = sbr.rel (%p318) target = $region48
        $region47: #{tpu_custom_call.1} parent=43 // pred_region
          %s321 = sand.u32 %s101, 1
          %s322 = scalar_lea.sflag [#allocation4], %s321
          %s323 = sand.u32 %s101, 1
          %s324 = smul.addr %s323, 12
          %s325 = scalar_lea.vmem [#allocation7], %s324
          %327 = dma.done %s322, 192
        $region48: #{tpu_custom_call.1} parent=43 // pred_fallthru
          _
      $region44: #{tpu_custom_call.1} parent=5 // pred_fallthru
        _
    $region6: #{tpu_custom_call.1} parent=1 // loop_footer
      %s21 = sadd.s32 1, %s17
    $region7: #{tpu_custom_call.1} parent=1 // loop_footer_branch
      %16 = sbr.rel target = $region3
    $region8: #{tpu_custom_call.1} parent=1 // loop_exit
      _
    %328 = vsyncpa [#allocation3], 1
    %s329 = scalar_lea.sflag [#allocation3], 1
    %330 = vsyncpa %s329, 1
    %331 = vsyncpa [#allocation6], 1
    %s332 = scalar_lea.sflag [#allocation6], 1
    %333 = vsyncpa %s332, 1
    %334 = vsyncpa [#allocation4], 1
    %s335 = scalar_lea.sflag [#allocation4], 1
    %336 = vsyncpa %s335, 1

</llo_original>
